<compile_context>
chip_gen: v5e
topology: v5e:2x2
jax: 0.10.0
libtpu: 0.0.40
codegen_flags: <defaults>
</compile_context>

<pallas_src>
import numpy as np
import jax
import jax.numpy as jnp
from jax.experimental import pallas as pl
from jax.experimental.pallas import tpu as pltpu

VMEM = pltpu.MemorySpace.VMEM
SMEM = pltpu.MemorySpace.SMEM


def _softmax(x, axis):
    m = jnp.max(x, axis=axis, keepdims=True)
    e = jnp.exp(x - m)
    return e / jnp.sum(e, axis=axis, keepdims=True)


# ------------------------------------------------------------ fused kernel --

def _make_fused_kernel(n_layers, out_nodes, out_size):
    """Kernel args: x, s_t_0..s_t_{L-1} (transposed assignments), gpool_w,
    gpred_w, emb_wt, emb_b, biases(SMEM), out.
    out_nodes[i] = cluster count produced by pooling layer i."""

    def kernel(*refs):
        x_ref = refs[0]
        s_t_refs = refs[1:1 + n_layers]           # each (N_out_i, N_in_i)
        gpool_w_ref = refs[1 + n_layers]          # (L, N0)
        gpred_w_ref = refs[2 + n_layers]          # (L, D)
        emb_wt_ref = refs[3 + n_layers]           # (D, OUT)
        emb_b_ref = refs[4 + n_layers]            # (1, OUT)
        biases_ref = refs[5 + n_layers]           # SMEM (2*L,)
        o_ref = refs[6 + n_layers]                # (N0, OUT*L)

        x_cur = x_ref[...]                        # (N0, D)
        emb_wt = emb_wt_ref[...]
        emb_b = emb_b_ref[...]
        gpool_w = gpool_w_ref[...]
        gpred_w = gpred_w_ref[...]

        x_pooled, ut_mats, logits = [], [], []
        ut = None
        for idx in range(n_layers):
            s_t = s_t_refs[idx][...]                              # (N_out, N_in)

            # pool down: softmax(s, -1).T @ x  ==  softmax(s_t, 0) @ x
            pd = _softmax(s_t, axis=0)
            x_cur = jnp.dot(pd, x_cur, preferred_element_type=jnp.float32)

            # cumulative transposed up-projection:
            #   Ut_idx = p_up_idx.T @ Ut_{idx-1},  p_up_idx.T = softmax(s_t, -1)
            pu_t = _softmax(s_t, axis=-1)
            ut = pu_t if idx == 0 else jnp.dot(
                pu_t, ut, preferred_element_type=jnp.float32)     # (N_out, N0)

            x_pooled.append(x_cur)
            ut_mats.append(ut)

            # gate logit — pure VPU/XLU (no MXU):
            #   a[m]  = sum_n U[n,m] * gpool_w[n]        (lane reduce)
            #   gp[d] = sum_m a[m] * x_pooled[m,d] + b   (sublane reduce)
            #   logit = sum_d gp[d] * gpred_w[d] + b     (lane reduce)
            a_col = jnp.sum(ut * gpool_w[idx:idx + 1, :],
                            axis=-1, keepdims=True)               # (N_out, 1)
            gp_row = (jnp.sum(a_col * x_cur, axis=0, keepdims=True)
                      + biases_ref[2 * idx])                      # (1, D)
            logits.append(jnp.sum(gp_row * gpred_w[idx:idx + 1, :],
                                  axis=-1, keepdims=True)
                          + biases_ref[2 * idx + 1])              # (1, 1)

        # vectorized gate softmax: one max/exp/sum over the (L, 1) logits
        gate_w = _softmax(jnp.concatenate(logits, axis=0), axis=0)  # (L, 1)

        # batched output embedding: one MXU matmul for all layers
        x_all = jnp.concatenate(x_pooled, axis=0)                  # (sum_N, D)
        y_all = jnp.dot(x_all, emb_wt,
                        preferred_element_type=jnp.float32)        # (sum_N, OUT)

        # up-project + gate-scale + direct slice stores (no lane concat)
        off = 0
        for idx in range(n_layers):
            n_out = out_nodes[idx]
            g = gate_w[idx:idx + 1, :]                             # (1, 1)
            y = y_all[off:off + n_out, :] * g                      # fold gate early
            blk = jax.lax.dot_general(
                ut_mats[idx], y,
                dimension_numbers=(((0,), (0,)), ((), ())),
                preferred_element_type=jnp.float32)                # (N0, OUT)
            o_ref[:, idx * out_size:(idx + 1) * out_size] = blk + emb_b * g
            off += n_out

    return kernel


# --------------------------------------------------------------- parameters -

def init_params(key, in_size, out_size, init_nodes, pool_layers):
    nodes = [init_nodes] + list(pool_layers)
    n_layers = len(nodes) - 1
    keys = iter(jax.random.split(key, 5 * n_layers + 2))

    layers = [jax.random.uniform(next(keys), (1, nodes[i], nodes[i + 1]),
                                 dtype=jnp.float32)
              for i in range(n_layers)]

    gate_pool_w, gate_pool_b, gate_pred_w, gate_pred_b = [], [], [], []
    lim_pool = float(init_nodes) ** -0.5
    lim_pred = float(in_size) ** -0.5
    for _ in range(n_layers):
        gate_pool_w.append(jax.random.uniform(
            next(keys), (1, init_nodes), minval=-lim_pool, maxval=lim_pool,
            dtype=jnp.float32))
        gate_pool_b.append(jax.random.uniform(
            next(keys), (1,), minval=-lim_pool, maxval=lim_pool,
            dtype=jnp.float32))
        gate_pred_w.append(jax.random.uniform(
            next(keys), (1, in_size), minval=-lim_pred, maxval=lim_pred,
            dtype=jnp.float32))
        gate_pred_b.append(jax.random.uniform(
            next(keys), (1,), minval=-lim_pred, maxval=lim_pred,
            dtype=jnp.float32))

    emb_w = jax.random.uniform(next(keys), (out_size, in_size),
                               minval=-lim_pred, maxval=lim_pred,
                               dtype=jnp.float32)
    emb_b = jax.random.uniform(next(keys), (out_size,),
                               minval=-lim_pred, maxval=lim_pred,
                               dtype=jnp.float32)

    return dict(layers=layers, gate_pool_w=gate_pool_w, gate_pool_b=gate_pool_b,
                gate_pred_w=gate_pred_w, gate_pred_b=gate_pred_b,
                emb_w=emb_w, emb_b=emb_b)


# ----------------------------------------------------------------- forward --

def diffpool_pallas(x, params):
    """x: (1, N0, D) -> (1, N0, OUT, L). Single fused pallas_call."""
    n_layers = len(params["layers"])
    n0, d = x.shape[1], x.shape[2]
    out_size = params["emb_w"].shape[0]
    out_nodes = [p.shape[2] for p in params["layers"]]

    # host-side packing (layout plumbing only)
    x2 = x[0].astype(jnp.float32)                                  # (N0, D)
    # assignment matrices passed TRANSPOSED -> in-kernel math is row-major
    s_t_list = [jnp.transpose(p[0]).astype(jnp.float32)
                for p in params["layers"]]                         # (N_out, N_in)
    gpool_w = jnp.concatenate(params["gate_pool_w"], axis=0)       # (L, N0)
    gpred_w = jnp.concatenate(params["gate_pred_w"], axis=0)       # (L, D)
    biases = jnp.stack(
        [jnp.concatenate([params["gate_pool_b"][i], params["gate_pred_b"][i]])
         for i in range(n_layers)]).reshape(-1)                    # (2L,)
    emb_wt = params["emb_w"].T                                     # (D, OUT)
    emb_b = params["emb_b"][None, :]                               # (1, OUT)

    kernel = _make_fused_kernel(n_layers, out_nodes, out_size)
    in_specs = ([pl.BlockSpec(memory_space=VMEM)] * (1 + n_layers + 4)
                + [pl.BlockSpec(memory_space=SMEM)])

    # TODO(synk): at production N0/D add a "parallel" grid over N0 row-tiles
    # (and a batch axis) so v7x's second TensorCore is used and the all-
    # resident footprint fits its 64 MiB VMEM; also cast MXU operands to bf16.
    out = pl.pallas_call(
        kernel,
        out_shape=jax.ShapeDtypeStruct((n0, out_size * n_layers), jnp.float32),
        in_specs=in_specs,
        out_specs=pl.BlockSpec(memory_space=VMEM),
        compiler_params=pltpu.CompilerParams(
            vmem_limit_bytes=32 * 1024 * 1024),
    )(x2, *s_t_list, gpool_w, gpred_w, emb_wt, emb_b, biases)

    # (N0, L*OUT) -> (1, N0, OUT, L): host-side layout only
    out = out.reshape(n0, n_layers, out_size)
    return jnp.transpose(out, (0, 2, 1))[None]


# --------------------------------------------------- pure-JAX reference -----

def diffpool_reference(x, params):
    n_layers = len(params["layers"])
    W_emb, b_emb = params["emb_w"], params["emb_b"]
    layer_reverse, gate_logits = [], []
    for idx in range(n_layers):
        s = params["layers"][idx]
        x = jnp.matmul(jnp.swapaxes(jax.nn.softmax(s, axis=-1), 1, 2), x)
        x_prev = x
        for s_prev in params["layers"][: idx + 1][::-1]:
            x_prev = jnp.matmul(jax.nn.softmax(s_prev, axis=1), x_prev)
        layer_reverse.append(jnp.matmul(x_prev, W_emb.T) + b_emb)
        g = (jnp.matmul(jnp.swapaxes(x_prev, 1, 2),
                        params["gate_pool_w"][idx].T)
             + params["gate_pool_b"][idx])
        g = jnp.squeeze(g, 2)
        gp = jnp.matmul(g, params["gate_pred_w"][idx].T) + params["gate_pred_b"][idx]
        gate_logits.append(gp)
    gate_pred = jax.nn.softmax(jnp.concatenate(gate_logits, 1), axis=1)
    gate_pred = gate_pred[:, None, None, :]
    return jnp.stack(layer_reverse, -1) * gate_pred


if __name__ == "__main__":
    in_size, out_size, start_clust = 32, 16, 8
    pool_layers = [4, 2, 1]

    key = jax.random.PRNGKey(0)
    k_param, k_x = jax.random.split(key)
    params = init_params(k_param, in_size, out_size, start_clust, pool_layers)
    x = jax.random.normal(k_x, (1, start_clust, in_size), dtype=jnp.float32)

    out = diffpool_pallas(x, params)
    out = jax.block_until_ready(out)

    ref = diffpool_reference(x, params)
    assert out.shape == (1, start_clust, out_size, len(pool_layers))
    np.testing.assert_allclose(np.asarray(out), np.asarray(ref),
                               rtol=1e-4, atol=1e-4)
    print("KERNEL_OK")
</pallas_src>

<mosaic_0001>
module attributes {stable_mosaic.version = 11 : i64} {
  func.func @kernel(%arg0: memref<8x32xf32, #tpu.memory_space<vmem>>, %arg1: memref<4x8xf32, #tpu.memory_space<vmem>>, %arg2: memref<2x4xf32, #tpu.memory_space<vmem>>, %arg3: memref<1x2xf32, #tpu.memory_space<vmem>>, %arg4: memref<3x8xf32, #tpu.memory_space<vmem>>, %arg5: memref<3x32xf32, #tpu.memory_space<vmem>>, %arg6: memref<32x16xf32, #tpu.memory_space<vmem>>, %arg7: memref<1x16xf32, #tpu.memory_space<vmem>>, %arg8: memref<6xf32, #tpu.memory_space<smem>>, %arg9: memref<8x48xf32, #tpu.memory_space<vmem>>) attributes {dimension_semantics = [], scalar_prefetch = 0 : i64, scratch_operands = 0 : i64, tpu.core_type = #tpu.core_type<tc>} {
    %c0 = arith.constant 0 : index
    %c0_0 = arith.constant 0 : index
    %0 = vector.load %arg0[%c0, %c0_0] : memref<8x32xf32, #tpu.memory_space<vmem>>, vector<8x32xf32>
    %c0_1 = arith.constant 0 : index
    %c0_2 = arith.constant 0 : index
    %1 = vector.load %arg6[%c0_1, %c0_2] : memref<32x16xf32, #tpu.memory_space<vmem>>, vector<32x16xf32>
    %c0_3 = arith.constant 0 : index
    %c0_4 = arith.constant 0 : index
    %2 = vector.load %arg7[%c0_3, %c0_4] : memref<1x16xf32, #tpu.memory_space<vmem>>, vector<1x16xf32>
    %c0_5 = arith.constant 0 : index
    %c0_6 = arith.constant 0 : index
    %3 = vector.load %arg4[%c0_5, %c0_6] : memref<3x8xf32, #tpu.memory_space<vmem>>, vector<3x8xf32>
    %c0_7 = arith.constant 0 : index
    %c0_8 = arith.constant 0 : index
    %4 = vector.load %arg5[%c0_7, %c0_8] : memref<3x32xf32, #tpu.memory_space<vmem>>, vector<3x32xf32>
    %c0_9 = arith.constant 0 : index
    %c0_10 = arith.constant 0 : index
    %5 = vector.load %arg1[%c0_9, %c0_10] : memref<4x8xf32, #tpu.memory_space<vmem>>, vector<4x8xf32>
    %cst = arith.constant dense<0xFF800000> : vector<8xf32>
    %6 = vector.multi_reduction <maximumf>, %5, %cst [0] : vector<4x8xf32> to vector<8xf32>
    %7 = vector.shape_cast %6 : vector<8xf32> to vector<1x8xf32>
    %8 = vector.broadcast %7 : vector<1x8xf32> to vector<4x8xf32>
    %9 = arith.subf %5, %8 : vector<4x8xf32>
    %10 = math.exp %9 : vector<4x8xf32>
    %cst_11 = arith.constant dense<0.000000e+00> : vector<8xf32>
    %11 = vector.multi_reduction <add>, %10, %cst_11 [0] : vector<4x8xf32> to vector<8xf32>
    %12 = vector.shape_cast %11 : vector<8xf32> to vector<1x8xf32>
    %13 = vector.broadcast %12 : vector<1x8xf32> to vector<4x8xf32>
    %14 = arith.divf %10, %13 : vector<4x8xf32>
    %cst_12 = arith.constant dense<0.000000e+00> : vector<4x32xf32>
    %15 = tpu.matmul %14, %0, %cst_12 {dimension_numbers = #tpu.dot_dimension_numbers<[1], [0], [0], [1], [0, 0, 1, 1], [], []>} : vector<4x8xf32>, vector<8x32xf32>, vector<4x32xf32> -> vector<4x32xf32>
    %cst_13 = arith.constant dense<0xFF800000> : vector<4xf32>
    %16 = vector.multi_reduction <maximumf>, %5, %cst_13 [1] : vector<4x8xf32> to vector<4xf32>
    %17 = vector.shape_cast %16 : vector<4xf32> to vector<4x1xf32>
    %18 = vector.broadcast %17 : vector<4x1xf32> to vector<4x8xf32>
    %19 = arith.subf %5, %18 : vector<4x8xf32>
    %20 = math.exp %19 : vector<4x8xf32>
    %cst_14 = arith.constant dense<0.000000e+00> : vector<4xf32>
    %21 = vector.multi_reduction <add>, %20, %cst_14 [1] : vector<4x8xf32> to vector<4xf32>
    %22 = vector.shape_cast %21 : vector<4xf32> to vector<4x1xf32>
    %23 = vector.broadcast %22 : vector<4x1xf32> to vector<4x8xf32>
    %24 = arith.divf %20, %23 : vector<4x8xf32>
    %25 = vector.extract_strided_slice %3 {offsets = [0, 0], sizes = [1, 8], strides = [1, 1]} : vector<3x8xf32> to vector<1x8xf32>
    %26 = vector.broadcast %25 : vector<1x8xf32> to vector<4x8xf32>
    %27 = arith.mulf %24, %26 : vector<4x8xf32>
    %cst_15 = arith.constant dense<0.000000e+00> : vector<4xf32>
    %28 = vector.multi_reduction <add>, %27, %cst_15 [1] : vector<4x8xf32> to vector<4xf32>
    %29 = vector.shape_cast %28 : vector<4xf32> to vector<4x1xf32>
    %30 = vector.broadcast %29 : vector<4x1xf32> to vector<4x32xf32>
    %31 = arith.mulf %30, %15 : vector<4x32xf32>
    %cst_16 = arith.constant dense<0.000000e+00> : vector<32xf32>
    %32 = vector.multi_reduction <add>, %31, %cst_16 [0] : vector<4x32xf32> to vector<32xf32>
    %33 = vector.shape_cast %32 : vector<32xf32> to vector<1x32xf32>
    %c0_17 = arith.constant 0 : index
    %34 = memref.load %arg8[%c0_17] : memref<6xf32, #tpu.memory_space<smem>>
    %35 = vector.broadcast %34 : f32 to vector<1x32xf32>
    %36 = arith.addf %33, %35 : vector<1x32xf32>
    %37 = vector.extract_strided_slice %4 {offsets = [0, 0], sizes = [1, 32], strides = [1, 1]} : vector<3x32xf32> to vector<1x32xf32>
    %38 = arith.mulf %36, %37 : vector<1x32xf32>
    %cst_18 = arith.constant dense<0.000000e+00> : vector<1xf32>
    %39 = vector.multi_reduction <add>, %38, %cst_18 [1] : vector<1x32xf32> to vector<1xf32>
    %40 = vector.shape_cast %39 : vector<1xf32> to vector<1x1xf32>
    %c1 = arith.constant 1 : index
    %41 = memref.load %arg8[%c1] : memref<6xf32, #tpu.memory_space<smem>>
    %42 = vector.broadcast %41 : f32 to vector<1x1xf32>
    %43 = arith.addf %40, %42 : vector<1x1xf32>
    %c0_19 = arith.constant 0 : index
    %c0_20 = arith.constant 0 : index
    %44 = vector.load %arg2[%c0_19, %c0_20] : memref<2x4xf32, #tpu.memory_space<vmem>>, vector<2x4xf32>
    %cst_21 = arith.constant dense<0xFF800000> : vector<4xf32>
    %45 = vector.multi_reduction <maximumf>, %44, %cst_21 [0] : vector<2x4xf32> to vector<4xf32>
    %46 = vector.shape_cast %45 : vector<4xf32> to vector<1x4xf32>
    %47 = vector.broadcast %46 : vector<1x4xf32> to vector<2x4xf32>
    %48 = arith.subf %44, %47 : vector<2x4xf32>
    %49 = math.exp %48 : vector<2x4xf32>
    %cst_22 = arith.constant dense<0.000000e+00> : vector<4xf32>
    %50 = vector.multi_reduction <add>, %49, %cst_22 [0] : vector<2x4xf32> to vector<4xf32>
    %51 = vector.shape_cast %50 : vector<4xf32> to vector<1x4xf32>
    %52 = vector.broadcast %51 : vector<1x4xf32> to vector<2x4xf32>
    %53 = arith.divf %49, %52 : vector<2x4xf32>
    %cst_23 = arith.constant dense<0.000000e+00> : vector<2x32xf32>
    %54 = tpu.matmul %53, %15, %cst_23 {dimension_numbers = #tpu.dot_dimension_numbers<[1], [0], [0], [1], [0, 0, 1, 1], [], []>} : vector<2x4xf32>, vector<4x32xf32>, vector<2x32xf32> -> vector<2x32xf32>
    %cst_24 = arith.constant dense<0xFF800000> : vector<2xf32>
    %55 = vector.multi_reduction <maximumf>, %44, %cst_24 [1] : vector<2x4xf32> to vector<2xf32>
    %56 = vector.shape_cast %55 : vector<2xf32> to vector<2x1xf32>
    %57 = vector.broadcast %56 : vector<2x1xf32> to vector<2x4xf32>
    %58 = arith.subf %44, %57 : vector<2x4xf32>
    %59 = math.exp %58 : vector<2x4xf32>
    %cst_25 = arith.constant dense<0.000000e+00> : vector<2xf32>
    %60 = vector.multi_reduction <add>, %59, %cst_25 [1] : vector<2x4xf32> to vector<2xf32>
    %61 = vector.shape_cast %60 : vector<2xf32> to vector<2x1xf32>
    %62 = vector.broadcast %61 : vector<2x1xf32> to vector<2x4xf32>
    %63 = arith.divf %59, %62 : vector<2x4xf32>
    %cst_26 = arith.constant dense<0.000000e+00> : vector<2x8xf32>
    %64 = tpu.matmul %63, %24, %cst_26 {dimension_numbers = #tpu.dot_dimension_numbers<[1], [0], [0], [1], [0, 0, 1, 1], [], []>} : vector<2x4xf32>, vector<4x8xf32>, vector<2x8xf32> -> vector<2x8xf32>
    %65 = vector.extract_strided_slice %3 {offsets = [1, 0], sizes = [1, 8], strides = [1, 1]} : vector<3x8xf32> to vector<1x8xf32>
    %66 = vector.broadcast %65 : vector<1x8xf32> to vector<2x8xf32>
    %67 = arith.mulf %64, %66 : vector<2x8xf32>
    %cst_27 = arith.constant dense<0.000000e+00> : vector<2xf32>
    %68 = vector.multi_reduction <add>, %67, %cst_27 [1] : vector<2x8xf32> to vector<2xf32>
    %69 = vector.shape_cast %68 : vector<2xf32> to vector<2x1xf32>
    %70 = vector.broadcast %69 : vector<2x1xf32> to vector<2x32xf32>
    %71 = arith.mulf %70, %54 : vector<2x32xf32>
    %cst_28 = arith.constant dense<0.000000e+00> : vector<32xf32>
    %72 = vector.multi_reduction <add>, %71, %cst_28 [0] : vector<2x32xf32> to vector<32xf32>
    %73 = vector.shape_cast %72 : vector<32xf32> to vector<1x32xf32>
    %c2 = arith.constant 2 : index
    %74 = memref.load %arg8[%c2] : memref<6xf32, #tpu.memory_space<smem>>
    %75 = vector.broadcast %74 : f32 to vector<1x32xf32>
    %76 = arith.addf %73, %75 : vector<1x32xf32>
    %77 = vector.extract_strided_slice %4 {offsets = [1, 0], sizes = [1, 32], strides = [1, 1]} : vector<3x32xf32> to vector<1x32xf32>
    %78 = arith.mulf %76, %77 : vector<1x32xf32>
    %cst_29 = arith.constant dense<0.000000e+00> : vector<1xf32>
    %79 = vector.multi_reduction <add>, %78, %cst_29 [1] : vector<1x32xf32> to vector<1xf32>
    %80 = vector.shape_cast %79 : vector<1xf32> to vector<1x1xf32>
    %c3 = arith.constant 3 : index
    %81 = memref.load %arg8[%c3] : memref<6xf32, #tpu.memory_space<smem>>
    %82 = vector.broadcast %81 : f32 to vector<1x1xf32>
    %83 = arith.addf %80, %82 : vector<1x1xf32>
    %c0_30 = arith.constant 0 : index
    %c0_31 = arith.constant 0 : index
    %84 = vector.load %arg3[%c0_30, %c0_31] : memref<1x2xf32, #tpu.memory_space<vmem>>, vector<1x2xf32>
    %cst_32 = arith.constant dense<0xFF800000> : vector<2xf32>
    %85 = vector.multi_reduction <maximumf>, %84, %cst_32 [0] : vector<1x2xf32> to vector<2xf32>
    %86 = vector.shape_cast %85 : vector<2xf32> to vector<1x2xf32>
    %87 = arith.subf %84, %86 : vector<1x2xf32>
    %88 = math.exp %87 : vector<1x2xf32>
    %cst_33 = arith.constant dense<0.000000e+00> : vector<2xf32>
    %89 = vector.multi_reduction <add>, %88, %cst_33 [0] : vector<1x2xf32> to vector<2xf32>
    %90 = vector.shape_cast %89 : vector<2xf32> to vector<1x2xf32>
    %91 = arith.divf %88, %90 : vector<1x2xf32>
    %cst_34 = arith.constant dense<0.000000e+00> : vector<1x32xf32>
    %92 = tpu.matmul %91, %54, %cst_34 {dimension_numbers = #tpu.dot_dimension_numbers<[1], [0], [0], [1], [0, 0, 1, 1], [], []>} : vector<1x2xf32>, vector<2x32xf32>, vector<1x32xf32> -> vector<1x32xf32>
    %cst_35 = arith.constant dense<0xFF800000> : vector<1xf32>
    %93 = vector.multi_reduction <maximumf>, %84, %cst_35 [1] : vector<1x2xf32> to vector<1xf32>
    %94 = vector.shape_cast %93 : vector<1xf32> to vector<1x1xf32>
    %95 = vector.broadcast %94 : vector<1x1xf32> to vector<1x2xf32>
    %96 = arith.subf %84, %95 : vector<1x2xf32>
    %97 = math.exp %96 : vector<1x2xf32>
    %cst_36 = arith.constant dense<0.000000e+00> : vector<1xf32>
    %98 = vector.multi_reduction <add>, %97, %cst_36 [1] : vector<1x2xf32> to vector<1xf32>
    %99 = vector.shape_cast %98 : vector<1xf32> to vector<1x1xf32>
    %100 = vector.broadcast %99 : vector<1x1xf32> to vector<1x2xf32>
    %101 = arith.divf %97, %100 : vector<1x2xf32>
    %cst_37 = arith.constant dense<0.000000e+00> : vector<1x8xf32>
    %102 = tpu.matmul %101, %64, %cst_37 {dimension_numbers = #tpu.dot_dimension_numbers<[1], [0], [0], [1], [0, 0, 1, 1], [], []>} : vector<1x2xf32>, vector<2x8xf32>, vector<1x8xf32> -> vector<1x8xf32>
    %103 = vector.extract_strided_slice %3 {offsets = [2, 0], sizes = [1, 8], strides = [1, 1]} : vector<3x8xf32> to vector<1x8xf32>
    %104 = arith.mulf %102, %103 : vector<1x8xf32>
    %cst_38 = arith.constant dense<0.000000e+00> : vector<1xf32>
    %105 = vector.multi_reduction <add>, %104, %cst_38 [1] : vector<1x8xf32> to vector<1xf32>
    %106 = vector.shape_cast %105 : vector<1xf32> to vector<1x1xf32>
    %107 = vector.broadcast %106 : vector<1x1xf32> to vector<1x32xf32>
    %108 = arith.mulf %107, %92 : vector<1x32xf32>
    %cst_39 = arith.constant dense<0.000000e+00> : vector<32xf32>
    %109 = vector.multi_reduction <add>, %108, %cst_39 [0] : vector<1x32xf32> to vector<32xf32>
    %110 = vector.shape_cast %109 : vector<32xf32> to vector<1x32xf32>
    %c4 = arith.constant 4 : index
    %111 = memref.load %arg8[%c4] : memref<6xf32, #tpu.memory_space<smem>>
    %112 = vector.broadcast %111 : f32 to vector<1x32xf32>
    %113 = arith.addf %110, %112 : vector<1x32xf32>
    %114 = vector.extract_strided_slice %4 {offsets = [2, 0], sizes = [1, 32], strides = [1, 1]} : vector<3x32xf32> to vector<1x32xf32>
    %115 = arith.mulf %113, %114 : vector<1x32xf32>
    %cst_40 = arith.constant dense<0.000000e+00> : vector<1xf32>
    %116 = vector.multi_reduction <add>, %115, %cst_40 [1] : vector<1x32xf32> to vector<1xf32>
    %117 = vector.shape_cast %116 : vector<1xf32> to vector<1x1xf32>
    %c5 = arith.constant 5 : index
    %118 = memref.load %arg8[%c5] : memref<6xf32, #tpu.memory_space<smem>>
    %119 = vector.broadcast %118 : f32 to vector<1x1xf32>
    %120 = arith.addf %117, %119 : vector<1x1xf32>
    %121 = tpu.concatenate %43, %83, %120 in 0 : vector<1x1xf32>, vector<1x1xf32>, vector<1x1xf32> -> vector<3x1xf32>
    %cst_41 = arith.constant dense<0xFF800000> : vector<1xf32>
    %122 = vector.multi_reduction <maximumf>, %121, %cst_41 [0] : vector<3x1xf32> to vector<1xf32>
    %123 = vector.shape_cast %122 : vector<1xf32> to vector<1x1xf32>
    %124 = vector.broadcast %123 : vector<1x1xf32> to vector<3x1xf32>
    %125 = arith.subf %121, %124 : vector<3x1xf32>
    %126 = math.exp %125 : vector<3x1xf32>
    %cst_42 = arith.constant dense<0.000000e+00> : vector<1xf32>
    %127 = vector.multi_reduction <add>, %126, %cst_42 [0] : vector<3x1xf32> to vector<1xf32>
    %128 = vector.shape_cast %127 : vector<1xf32> to vector<1x1xf32>
    %129 = vector.broadcast %128 : vector<1x1xf32> to vector<3x1xf32>
    %130 = arith.divf %126, %129 : vector<3x1xf32>
    %131 = tpu.concatenate %15, %54, %92 in 0 : vector<4x32xf32>, vector<2x32xf32>, vector<1x32xf32> -> vector<7x32xf32>
    %cst_43 = arith.constant dense<0.000000e+00> : vector<7x16xf32>
    %132 = tpu.matmul %131, %1, %cst_43 {dimension_numbers = #tpu.dot_dimension_numbers<[1], [0], [0], [1], [0, 0, 1, 1], [], []>} : vector<7x32xf32>, vector<32x16xf32>, vector<7x16xf32> -> vector<7x16xf32>
    %133 = vector.extract_strided_slice %130 {offsets = [0, 0], sizes = [1, 1], strides = [1, 1]} : vector<3x1xf32> to vector<1x1xf32>
    %134 = vector.extract_strided_slice %132 {offsets = [0, 0], sizes = [4, 16], strides = [1, 1]} : vector<7x16xf32> to vector<4x16xf32>
    %135 = vector.broadcast %133 : vector<1x1xf32> to vector<4x16xf32>
    %136 = arith.mulf %134, %135 : vector<4x16xf32>
    %cst_44 = arith.constant dense<0.000000e+00> : vector<8x16xf32>
    %137 = tpu.matmul %24, %136, %cst_44 {dimension_numbers = #tpu.dot_dimension_numbers<[0], [0], [1], [1], [0, 1, 1, 1], [], []>} : vector<4x8xf32>, vector<4x16xf32>, vector<8x16xf32> -> vector<8x16xf32>
    %138 = vector.broadcast %133 : vector<1x1xf32> to vector<1x16xf32>
    %139 = arith.mulf %2, %138 : vector<1x16xf32>
    %140 = vector.broadcast %139 : vector<1x16xf32> to vector<8x16xf32>
    %141 = arith.addf %137, %140 : vector<8x16xf32>
    %c0_45 = arith.constant 0 : index
    %c0_46 = arith.constant 0 : index
    %142 = vector.load %arg9[%c0_45, %c0_46] : memref<8x48xf32, #tpu.memory_space<vmem>>, vector<8x16xf32>
    tpu.vector_store %arg9[%c0_45, %c0_46], %141 {strides = array<i32>} : memref<8x48xf32, #tpu.memory_space<vmem>>, vector<8x16xf32>,
    %143 = vector.extract_strided_slice %130 {offsets = [1, 0], sizes = [1, 1], strides = [1, 1]} : vector<3x1xf32> to vector<1x1xf32>
    %144 = vector.extract_strided_slice %132 {offsets = [4, 0], sizes = [2, 16], strides = [1, 1]} : vector<7x16xf32> to vector<2x16xf32>
    %145 = vector.broadcast %143 : vector<1x1xf32> to vector<2x16xf32>
    %146 = arith.mulf %144, %145 : vector<2x16xf32>
    %cst_47 = arith.constant dense<0.000000e+00> : vector<8x16xf32>
    %147 = tpu.matmul %64, %146, %cst_47 {dimension_numbers = #tpu.dot_dimension_numbers<[0], [0], [1], [1], [0, 1, 1, 1], [], []>} : vector<2x8xf32>, vector<2x16xf32>, vector<8x16xf32> -> vector<8x16xf32>
    %148 = vector.broadcast %143 : vector<1x1xf32> to vector<1x16xf32>
    %149 = arith.mulf %2, %148 : vector<1x16xf32>
    %150 = vector.broadcast %149 : vector<1x16xf32> to vector<8x16xf32>
    %151 = arith.addf %147, %150 : vector<8x16xf32>
    %c0_48 = arith.constant 0 : index
    %c16 = arith.constant 16 : index
    %152 = vector.load %arg9[%c0_48, %c16] : memref<8x48xf32, #tpu.memory_space<vmem>>, vector<8x16xf32>
    tpu.vector_store %arg9[%c0_48, %c16], %151 {strides = array<i32>} : memref<8x48xf32, #tpu.memory_space<vmem>>, vector<8x16xf32>,
    %153 = vector.extract_strided_slice %130 {offsets = [2, 0], sizes = [1, 1], strides = [1, 1]} : vector<3x1xf32> to vector<1x1xf32>
    %154 = vector.extract_strided_slice %132 {offsets = [6, 0], sizes = [1, 16], strides = [1, 1]} : vector<7x16xf32> to vector<1x16xf32>
    %155 = vector.broadcast %153 : vector<1x1xf32> to vector<1x16xf32>
    %156 = arith.mulf %154, %155 : vector<1x16xf32>
    %cst_49 = arith.constant dense<0.000000e+00> : vector<8x16xf32>
    %157 = tpu.matmul %102, %156, %cst_49 {dimension_numbers = #tpu.dot_dimension_numbers<[0], [0], [1], [1], [0, 1, 1, 1], [], []>} : vector<1x8xf32>, vector<1x16xf32>, vector<8x16xf32> -> vector<8x16xf32>
    %158 = vector.broadcast %153 : vector<1x1xf32> to vector<1x16xf32>
    %159 = arith.mulf %2, %158 : vector<1x16xf32>
    %160 = vector.broadcast %159 : vector<1x16xf32> to vector<8x16xf32>
    %161 = arith.addf %157, %160 : vector<8x16xf32>
    %c0_50 = arith.constant 0 : index
    %c32 = arith.constant 32 : index
    %162 = vector.load %arg9[%c0_50, %c32] : memref<8x48xf32, #tpu.memory_space<vmem>>, vector<8x16xf32>
    tpu.vector_store %arg9[%c0_50, %c32], %161 {strides = array<i32>} : memref<8x48xf32, #tpu.memory_space<vmem>>, vector<8x16xf32>,
    return
  }
}

</mosaic_0001>

<llo_original>
// kernel: tpu_custom_call.1
$region0: #{tpu_custom_call.1}
  #allocation0 [shape = 'u32[]', space=smem, size = 0x4, offset = 0x4, fixed_abs, tag = 'smem constant byte address 0x4 - core index']
  #allocation1 [shape = 'u32[72,128]{1,0:T(1,128)}', space=vmem, size = 0x9000, scoped, tag = 'internal scratch']
  %s0 = inlined_call_operand.vmem [shape: f32[8,32], index: 0, kind: input, shape index: {}]
  %s1 = inlined_call_operand.vmem [shape: f32[4,8], index: 1, kind: input, shape index: {}]
  %s2 = inlined_call_operand.vmem [shape: f32[2,4], index: 2, kind: input, shape index: {}]
  %s3 = inlined_call_operand.vmem [shape: f32[1,2], index: 3, kind: input, shape index: {}]
  %s4 = inlined_call_operand.vmem [shape: f32[3,8], index: 4, kind: input, shape index: {}]
  %s5 = inlined_call_operand.vmem [shape: f32[3,32], index: 5, kind: input, shape index: {}]
  %s6 = inlined_call_operand.vmem [shape: f32[32,16], index: 6, kind: input, shape index: {}]
  %s7 = inlined_call_operand.vmem [shape: f32[1,16], index: 7, kind: input, shape index: {}]
  %s8 = inlined_call_operand.vmem [shape: f32[6], index: 8, kind: input, shape index: {}]
  %s9 = inlined_call_operand.hbm [shape: f32[8,48], index: 9, kind: output, shape index: {}]
  %s10 = sld [smem:[#allocation0]]
  $region50: #{tpu_custom_call.1} parent=0
    _
  %s12 = ssub.s32 1, %s10
  %s13 = scalar_select 0, %s12, %s10
  $region1: #{tpu_custom_call.1} parent=0
    #allocation2 [shape = 'u8[512]{0}', space=smem, size = 0x200, scoped, tag = 'input window, operand 8, single buffered']
    #allocation3 [shape = 's32[1]{0}', space=sflag, size = 0x4, scoped, tag = 'scoped memory for tpu_custom_call.1']
    #allocation4 [shape = 's32[1]{0}', space=sflag, size = 0x4, scoped, tag = 'scoped memory for tpu_custom_call.1']
    #allocation5 [shape = 'u8[4096]{0}', space=vmem, size = 0x1000, scoped, tag = 'output window, operand 0, single buffered']
    %14 = vsyncpa [#allocation4], 0
    %15 = vsyncpa [#allocation3], 0
    // Predicated region
    $region2: #{tpu_custom_call.1} parent=1 // pred_check
      _
    $region3: #{tpu_custom_call.1} parent=1 // pred_check_branch
      %17 = sbr.rel (0) target = $region5
    $region4: #{tpu_custom_call.1} parent=1 // pred_region
      _
    $region5: #{tpu_custom_call.1} parent=1 // pred_fallthru
      _
    // Predicated region
    $region6: #{tpu_custom_call.1} parent=1 // pred_check
      _
    $region7: #{tpu_custom_call.1} parent=1 // pred_check_branch
      %19 = sbr.rel (0) target = $region9
    $region8: #{tpu_custom_call.1} parent=1 // pred_region
      _
    $region9: #{tpu_custom_call.1} parent=1 // pred_fallthru
      _
    // Predicated region
    $region10: #{tpu_custom_call.1} parent=1 // pred_check
      _
    $region11: #{tpu_custom_call.1} parent=1 // pred_check_branch
      %21 = sbr.rel (0) target = $region13
    $region12: #{tpu_custom_call.1} parent=1 // pred_region
      _
    $region13: #{tpu_custom_call.1} parent=1 // pred_fallthru
      _
    // Predicated region
    $region14: #{tpu_custom_call.1} parent=1 // pred_check
      _
    $region15: #{tpu_custom_call.1} parent=1 // pred_check_branch
      %23 = sbr.rel (0) target = $region17
    $region16: #{tpu_custom_call.1} parent=1 // pred_region
      _
    $region17: #{tpu_custom_call.1} parent=1 // pred_fallthru
      _
    // Predicated region
    $region18: #{tpu_custom_call.1} parent=1 // pred_check
      _
    $region19: #{tpu_custom_call.1} parent=1 // pred_check_branch
      %25 = sbr.rel (0) target = $region21
    $region20: #{tpu_custom_call.1} parent=1 // pred_region
      _
    $region21: #{tpu_custom_call.1} parent=1 // pred_fallthru
      _
    // Predicated region
    $region22: #{tpu_custom_call.1} parent=1 // pred_check
      _
    $region23: #{tpu_custom_call.1} parent=1 // pred_check_branch
      %27 = sbr.rel (0) target = $region25
    $region24: #{tpu_custom_call.1} parent=1 // pred_region
      _
    $region25: #{tpu_custom_call.1} parent=1 // pred_fallthru
      _
    // Predicated region
    $region26: #{tpu_custom_call.1} parent=1 // pred_check
      _
    $region27: #{tpu_custom_call.1} parent=1 // pred_check_branch
      %29 = sbr.rel (0) target = $region29
    $region28: #{tpu_custom_call.1} parent=1 // pred_region
      _
    $region29: #{tpu_custom_call.1} parent=1 // pred_fallthru
      _
    // Predicated region
    $region30: #{tpu_custom_call.1} parent=1 // pred_check
      _
    $region31: #{tpu_custom_call.1} parent=1 // pred_check_branch
      %31 = sbr.rel (0) target = $region33
    $region32: #{tpu_custom_call.1} parent=1 // pred_region
      _
    $region33: #{tpu_custom_call.1} parent=1 // pred_fallthru
      _
    // Predicated region
    $region34: #{tpu_custom_call.1} parent=1 // pred_check
      _
    $region35: #{tpu_custom_call.1} parent=1 // pred_check_branch
      %33 = sbr.rel (0) target = $region37
    $region36: #{tpu_custom_call.1} parent=1 // pred_region
      %35 = vsyncadd [#allocation4], 0
      %s37 = sshll.u32 %s8, 4
      %s38 = int_to_ptr.vmem [resolvable:$true] %s37
      %40 = dma.vmem_to_smem %s38, 16, [#allocation2], [#allocation4]
    $region37: #{tpu_custom_call.1} parent=1 // pred_fallthru
      _
    // Predicated region
    $region38: #{tpu_custom_call.1} parent=1 // pred_check
      _
    $region39: #{tpu_custom_call.1} parent=1 // pred_check_branch
      %42 = sbr.rel (0) target = $region41
    $region40: #{tpu_custom_call.1} parent=1 // pred_region
      %44 = dma.done [#allocation4], 16
    $region41: #{tpu_custom_call.1} parent=1 // pred_fallthru
      _
    %45 = sfence
    %v46 = vld [vmem:[%s0] sm:$0xff]
    %v47 = vld [vmem:[%s6] sm:$0xff]
    %v48 = vld [vmem:[%s6 + $0x8] sm:$0xff]
    %v49 = vld [vmem:[%s6 + $0x10] sm:$0xff]
    %v50 = vld [vmem:[%s6 + $0x18] sm:$0xff]
    %v51 = vld [vmem:[%s7] sm:$0x1]
    %v52 = vld [vmem:[%s4] sm:$0x7]
    %v53 = vld [vmem:[%s5] sm:$0x7]
    %v54 = vld [vmem:[%s1] sm:$0xf]
    %vm55 = vcmask 60416
    %v56 = vsel %vm55, %v54, -inf
    %v57 = vrot.slane %v56, 4
    %v58 = vmax.f32 %v56, %v57
    %v59 = vrot.slane %v58, 2
    %v60 = vmax.f32 %v58, %v59
    %v61 = vrot.slane %v60, 1
    %v62 = vmax.f32 %v60, %v61
    %v63 = vsub.f32 %v54, %v62
    %v64 = vmul.f32 %v63, 1.442695
    %v65 = vpow.pop %v64
    %v66 = vsel %vm55, %v65, 0.0
    %v67 = vrot.slane %v66, 4
    %v68 = vadd.f32 %v66, %v67
    %v69 = vrot.slane %v68, 2
    %v70 = vadd.f32 %v68, %v69
    %v71 = vrot.slane %v70, 1
    %v72 = vadd.f32 %v70, %v71
    %v73 = vrcp.pop %v72
    %v74 = vmul.f32 %v72, %v73
    %v75 = vsub.f32 1.0, %v74
    %v76 = vmul.f32 %v73, %v75
    %v77 = vadd.f32 %v73, %v76
    %vm78 = vweird.f32 %v72
    %vm79 = vweird.f32 %v73
    %vm80 = vmor %vm78, %vm79
    %v81 = vsel %vm80, %v73, %v77
    %v82 = vand.u32 2147483647, %v72
    %vm83 = vcmp.eq.f32.partialorder %v82, 8.507059e+37
    %v84 = vand.u32 %v72, 2147483648
    %v85 = vor.u32 1.1754944e-38, %v84
    %v86 = vsel %vm83, %v85, %v81
    %v87 = vmul.f32 %v65, %v86
    %vm88 = vcmask 64512
    %v90 = vsel %vm88, %v87, 0
    %92 = vmatpush.msra.mxu0 0.0
    %93 = vmatpush.msra.mxu0 0.0
    %94 = vmatpush.msra.mxu0 0.0
    %95 = vmatpush.msra.mxu0 0.0
    %96 = vmatpush.msra.mxu0 0.0
    %97 = vmatpush.msra.mxu0 0.0
    %98 = vmatpush.msra.mxu0 0.0
    %99 = vmatpush.msra.mxu0 0.0
    %100 = vmatpush.msra.mxu0 0.0
    %101 = vmatpush.msra.mxu0 0.0
    %102 = vmatpush.msra.mxu0 0.0
    %103 = vmatpush.msra.mxu0 0.0
    %104 = vmatpush.msra.mxu0 0.0
    %105 = vmatpush.msra.mxu0 0.0
    %106 = vmatpush.msra.mxu0 0.0
    %107 = vmatpush.msra.mxu0 %v46
    %108 = vmatmul.f32.gmra.mxu0 %v90
    %v109 = vpop.f32.mrf.mxu0
    %v110 = vadd.f32 0.0, %v109
    %111 = vdwg.mxu0
    %112 = vmax.xlane.f32.xlu0 %v56
    %v113 = vpop.xlane.xlu0 %112
    %v114 = vsub.f32 %v54, %v113
    %v115 = vmul.f32 %v114, 1.442695
    %v116 = vpow.pop %v115
    %v117 = vsel %vm55, %v116, 0.0
    %118 = vadd.xlane.f32.xlu0 %v117
    %v119 = vpop.xlane.xlu0 %118
    %v120 = vrcp.pop %v119
    %v121 = vmul.f32 %v119, %v120
    %v122 = vsub.f32 1.0, %v121
    %v123 = vmul.f32 %v120, %v122
    %v124 = vadd.f32 %v120, %v123
    %vm125 = vweird.f32 %v119
    %vm126 = vweird.f32 %v120
    %vm127 = vmor %vm125, %vm126
    %v128 = vsel %vm127, %v120, %v124
    %v129 = vand.u32 2147483647, %v119
    %vm130 = vcmp.eq.f32.partialorder %v129, 8.507059e+37
    %v131 = vand.u32 %v119, 2147483648
    %v132 = vor.u32 1.1754944e-38, %v131
    %v133 = vsel %vm130, %v132, %v128
    %v134 = vmul.f32 %v116, %v133
    %v135 = vperm.slane %v52, 0
    %v136 = vmul.f32 %v134, %v135
    %v137 = vsel %vm55, %v136, 0.0
    %138 = vadd.xlane.f32.xlu0 %v137
    %v139 = vpop.xlane.xlu0 %138
    %v140 = vmul.f32 %v139, %v110
    %vm141 = vcmask 257024
    %v142 = vsel %vm141, %v140, 0.0
    %v143 = vrot.slane %v142, 4
    %v144 = vadd.f32 %v142, %v143
    %v145 = vrot.slane %v144, 2
    %v146 = vadd.f32 %v144, %v145
    %v147 = vrot.slane %v146, 1
    %v148 = vadd.f32 %v146, %v147
    %s149 = sld [smem:[#allocation2]]
    %v150 = vstv %s149
    %v151 = vadd.f32 %v148, %v150
    %v152 = vmul.f32 %v151, %v53
    %vm153 = vcmask 253952
    %v154 = vsel %vm153, %v152, 0.0
    %155 = vadd.xlane.f32.xlu0 %v154
    %v156 = vpop.xlane.xlu0 %155
    %s157 = sld [smem:[#allocation2 + $0x1]]
    %v158 = vstv %s157
    %v159 = vadd.f32 %v156, %v158
    %v160 = vld [vmem:[%s2] sm:$0x3]
    %vm161 = vcmask 25600
    %v162 = vsel %vm161, %v160, -inf
    %v163 = vrot.slane %v162, 4
    %v164 = vmax.f32 %v162, %v163
    %v165 = vrot.slane %v164, 2
    %v166 = vmax.f32 %v164, %v165
    %v167 = vrot.slane %v166, 1
    %v168 = vmax.f32 %v166, %v167
    %v169 = vsub.f32 %v160, %v168
    %v170 = vmul.f32 %v169, 1.442695
    %v171 = vpow.pop %v170
    %v172 = vsel %vm161, %v171, 0.0
    %v173 = vrot.slane %v172, 4
    %v174 = vadd.f32 %v172, %v173
    %v175 = vrot.slane %v174, 2
    %v176 = vadd.f32 %v174, %v175
    %v177 = vrot.slane %v176, 1
    %v178 = vadd.f32 %v176, %v177
    %v179 = vrcp.pop %v178
    %v180 = vmul.f32 %v178, %v179
    %v181 = vsub.f32 1.0, %v180
    %v182 = vmul.f32 %v179, %v181
    %v183 = vadd.f32 %v179, %v182
    %vm184 = vweird.f32 %v178
    %vm185 = vweird.f32 %v179
    %vm186 = vmor %vm184, %vm185
    %v187 = vsel %vm186, %v179, %v183
    %v188 = vand.u32 2147483647, %v178
    %vm189 = vcmp.eq.f32.partialorder %v188, 8.507059e+37
    %v190 = vand.u32 %v178, 2147483648
    %v191 = vor.u32 1.1754944e-38, %v190
    %v192 = vsel %vm189, %v191, %v187
    %v193 = vmul.f32 %v171, %v192
    %vm194 = vcmask 31744
    %v196 = vsel %vm194, %v193, 0
    %vm198 = vcmask 1043456
    %v200 = vsel %vm198, %v110, 0
    %202 = vmatpush.msra.mxu0 0.0
    %203 = vmatpush.msra.mxu0 0.0
    %204 = vmatpush.msra.mxu0 0.0
    %205 = vmatpush.msra.mxu0 0.0
    %206 = vmatpush.msra.mxu0 0.0
    %207 = vmatpush.msra.mxu0 0.0
    %208 = vmatpush.msra.mxu0 0.0
    %209 = vmatpush.msra.mxu0 0.0
    %210 = vmatpush.msra.mxu0 0.0
    %211 = vmatpush.msra.mxu0 0.0
    %212 = vmatpush.msra.mxu0 0.0
    %213 = vmatpush.msra.mxu0 0.0
    %214 = vmatpush.msra.mxu0 0.0
    %215 = vmatpush.msra.mxu0 0.0
    %216 = vmatpush.msra.mxu0 0.0
    %217 = vmatpush.msra.mxu0 %v200
    %218 = vmatmul.f32.gmra.mxu0 %v196
    %v219 = vpop.f32.mrf.mxu0
    %v220 = vadd.f32 0.0, %v219
    %221 = vdwg.mxu0
    %222 = vmax.xlane.f32.xlu0 %v162
    %v223 = vpop.xlane.xlu0 %222
    %v224 = vsub.f32 %v160, %v223
    %v225 = vmul.f32 %v224, 1.442695
    %v226 = vpow.pop %v225
    %v227 = vsel %vm161, %v226, 0.0
    %228 = vadd.xlane.f32.xlu0 %v227
    %v229 = vpop.xlane.xlu0 %228
    %v230 = vrcp.pop %v229
    %v231 = vmul.f32 %v229, %v230
    %v232 = vsub.f32 1.0, %v231
    %v233 = vmul.f32 %v230, %v232
    %v234 = vadd.f32 %v230, %v233
    %vm235 = vweird.f32 %v229
    %vm236 = vweird.f32 %v230
    %vm237 = vmor %vm235, %vm236
    %v238 = vsel %vm237, %v230, %v234
    %v239 = vand.u32 2147483647, %v229
    %vm240 = vcmp.eq.f32.partialorder %v239, 8.507059e+37
    %v241 = vand.u32 %v229, 2147483648
    %v242 = vor.u32 1.1754944e-38, %v241
    %v243 = vsel %vm240, %v242, %v238
    %v244 = vmul.f32 %v226, %v243
    %v246 = vsel %vm194, %v244, 0
    %v249 = vsel %vm198, %v134, 0
    %251 = vmatpush.msra.mxu0 0.0
    %252 = vmatpush.msra.mxu0 0.0
    %253 = vmatpush.msra.mxu0 0.0
    %254 = vmatpush.msra.mxu0 0.0
    %255 = vmatpush.msra.mxu0 0.0
    %256 = vmatpush.msra.mxu0 0.0
    %257 = vmatpush.msra.mxu0 0.0
    %258 = vmatpush.msra.mxu0 0.0
    %259 = vmatpush.msra.mxu0 0.0
    %260 = vmatpush.msra.mxu0 0.0
    %261 = vmatpush.msra.mxu0 0.0
    %262 = vmatpush.msra.mxu0 0.0
    %263 = vmatpush.msra.mxu0 0.0
    %264 = vmatpush.msra.mxu0 0.0
    %265 = vmatpush.msra.mxu0 0.0
    %266 = vmatpush.msra.mxu0 %v249
    %267 = vmatmul.f32.gmra.mxu0 %v246
    %v268 = vpop.f32.mrf.mxu0
    %v269 = vadd.f32 0.0, %v268
    %270 = vdwg.mxu0
    %v271 = vperm.slane %v52, 1
    %v272 = vmul.f32 %v269, %v271
    %vm273 = vcmask 58368
    %v274 = vsel %vm273, %v272, 0.0
    %275 = vadd.xlane.f32.xlu0 %v274
    %v276 = vpop.xlane.xlu0 %275
    %v277 = vmul.f32 %v276, %v220
    %vm278 = vcmask 254976
    %v279 = vsel %vm278, %v277, 0.0
    %v280 = vrot.slane %v279, 4
    %v281 = vadd.f32 %v279, %v280
    %v282 = vrot.slane %v281, 2
    %v283 = vadd.f32 %v281, %v282
    %v284 = vrot.slane %v283, 1
    %v285 = vadd.f32 %v283, %v284
    %s286 = sld [smem:[#allocation2 + $0x2]]
    %v287 = vstv %s286
    %v288 = vadd.f32 %v285, %v287
    %v289 = vmul.f32 %v288, %v53
    %vm290 = vcmask 254977
    %v291 = vsel %vm290, %v289, 0.0
    %292 = vadd.xlane.f32.xlu0 %v291
    %v293 = vpop.xlane.xlu0 %292
    %s294 = sld [smem:[#allocation2 + $0x3]]
    %v295 = vstv %s294
    %v296 = vadd.f32 %v293, %v295
    %v297 = vld [vmem:[%s3] sm:$0x1]
    %v298 = vsub.f32 %v297, %v297
    %v299 = vmul.f32 %v298, 1.442695
    %v300 = vpow.pop %v299
    %v301 = vadd.f32 %v300, 0.0
    %v302 = vrcp.pop %v301
    %v303 = vmul.f32 %v301, %v302
    %v304 = vsub.f32 1.0, %v303
    %v305 = vmul.f32 %v302, %v304
    %v306 = vadd.f32 %v302, %v305
    %vm307 = vweird.f32 %v301
    %vm308 = vweird.f32 %v302
    %vm309 = vmor %vm307, %vm308
    %v310 = vsel %vm309, %v302, %v306
    %v311 = vand.u32 2147483647, %v301
    %vm312 = vcmp.eq.f32.partialorder %v311, 8.507059e+37
    %v313 = vand.u32 %v301, 2147483648
    %v314 = vor.u32 1.1754944e-38, %v313
    %v315 = vsel %vm312, %v314, %v310
    %v316 = vmul.f32 %v300, %v315
    %vm317 = vcmask 15360
    %v319 = vsel %vm317, %v316, 0
    %vm321 = vcmask 1041408
    %v323 = vsel %vm321, %v220, 0
    %325 = vmatpush.msra.mxu0 0.0
    %326 = vmatpush.msra.mxu0 0.0
    %327 = vmatpush.msra.mxu0 0.0
    %328 = vmatpush.msra.mxu0 0.0
    %329 = vmatpush.msra.mxu0 0.0
    %330 = vmatpush.msra.mxu0 0.0
    %331 = vmatpush.msra.mxu0 0.0
    %332 = vmatpush.msra.mxu0 0.0
    %333 = vmatpush.msra.mxu0 0.0
    %334 = vmatpush.msra.mxu0 0.0
    %335 = vmatpush.msra.mxu0 0.0
    %336 = vmatpush.msra.mxu0 0.0
    %337 = vmatpush.msra.mxu0 0.0
    %338 = vmatpush.msra.mxu0 0.0
    %339 = vmatpush.msra.mxu0 0.0
    %340 = vmatpush.msra.mxu0 %v323
    %341 = vmatmul.f32.gmra.mxu0 %v319
    %v342 = vpop.f32.mrf.mxu0
    %v343 = vadd.f32 0.0, %v342
    %344 = vdwg.mxu0
    %vm345 = vcmask 8192
    %v346 = vsel %vm345, %v297, -inf
    %347 = vmax.xlane.f32.xlu0 %v346
    %v348 = vpop.xlane.xlu0 %347
    %v349 = vsub.f32 %v297, %v348
    %v350 = vmul.f32 %v349, 1.442695
    %v351 = vpow.pop %v350
    %v352 = vsel %vm345, %v351, 0.0
    %353 = vadd.xlane.f32.xlu0 %v352
    %v354 = vpop.xlane.xlu0 %353
    %v355 = vrcp.pop %v354
    %v356 = vmul.f32 %v354, %v355
    %v357 = vsub.f32 1.0, %v356
    %v358 = vmul.f32 %v355, %v357
    %v359 = vadd.f32 %v355, %v358
    %vm360 = vweird.f32 %v354
    %vm361 = vweird.f32 %v355
    %vm362 = vmor %vm360, %vm361
    %v363 = vsel %vm362, %v355, %v359
    %v364 = vand.u32 2147483647, %v354
    %vm365 = vcmp.eq.f32.partialorder %v364, 8.507059e+37
    %v366 = vand.u32 %v354, 2147483648
    %v367 = vor.u32 1.1754944e-38, %v366
    %v368 = vsel %vm365, %v367, %v363
    %v369 = vmul.f32 %v351, %v368
    %v371 = vsel %vm317, %v369, 0
    %v374 = vsel %vm321, %v269, 0
    %376 = vmatpush.msra.mxu0 0.0
    %377 = vmatpush.msra.mxu0 0.0
    %378 = vmatpush.msra.mxu0 0.0
    %379 = vmatpush.msra.mxu0 0.0
    %380 = vmatpush.msra.mxu0 0.0
    %381 = vmatpush.msra.mxu0 0.0
    %382 = vmatpush.msra.mxu0 0.0
    %383 = vmatpush.msra.mxu0 0.0
    %384 = vmatpush.msra.mxu0 0.0
    %385 = vmatpush.msra.mxu0 0.0
    %386 = vmatpush.msra.mxu0 0.0
    %387 = vmatpush.msra.mxu0 0.0
    %388 = vmatpush.msra.mxu0 0.0
    %389 = vmatpush.msra.mxu0 0.0
    %390 = vmatpush.msra.mxu0 0.0
    %391 = vmatpush.msra.mxu0 %v374
    %392 = vmatmul.f32.gmra.mxu0 %v371
    %v393 = vpop.f32.mrf.mxu0
    %v394 = vadd.f32 0.0, %v393
    %395 = vdwg.mxu0
    %v397 = vrot.slane %v52, 2
    %v399 = vmul.f32 %v394, %v397
    %vm400 = vcmask 57344
    %v401 = vsel %vm400, %v399, 0.0
    %402 = vadd.xlane.f32.xlu0 %v401
    %v403 = vpop.xlane.xlu0 %402
    %v404 = vmul.f32 %v403, %v343
    %v405 = vadd.f32 %v404, 0.0
    %s406 = sld [smem:[#allocation2 + $0x4]]
    %v407 = vstv %s406
    %v408 = vadd.f32 %v405, %v407
    %v410 = vrot.slane %v53, 2
    %v412 = vmul.f32 %v408, %v410
    %v413 = vsel %vm153, %v412, 0.0
    %414 = vadd.xlane.f32.xlu0 %v413
    %v415 = vpop.xlane.xlu0 %414
    %s416 = sld [smem:[#allocation2 + $0x5]]
    %v417 = vstv %s416
    %v418 = vadd.f32 %v415, %v417
    %v420 = vrot.slane %v418, 6
    %vm422 = vcmask 1040384
    %v423 = vsel %vm422, %v159, %v296
    %v424 = vsel %vm321, %v423, %v420
    %vm425 = vcmask 2048
    %v426 = vsel %vm425, %v424, -inf
    %v427 = vrot.slane %v426, 4
    %v428 = vmax.f32 %v426, %v427
    %v429 = vrot.slane %v428, 2
    %v430 = vmax.f32 %v428, %v429
    %v431 = vrot.slane %v430, 1
    %v432 = vmax.f32 %v430, %v431
    %v433 = vsub.f32 %v424, %v432
    %v434 = vmul.f32 %v433, 1.442695
    %v435 = vpow.pop %v434
    %v436 = vsel %vm425, %v435, 0.0
    %v437 = vrot.slane %v436, 4
    %v438 = vadd.f32 %v436, %v437
    %v439 = vrot.slane %v438, 2
    %v440 = vadd.f32 %v438, %v439
    %v441 = vrot.slane %v440, 1
    %v442 = vadd.f32 %v440, %v441
    %v443 = vrcp.pop %v442
    %v444 = vmul.f32 %v442, %v443
    %v445 = vsub.f32 1.0, %v444
    %v446 = vmul.f32 %v443, %v445
    %v447 = vadd.f32 %v443, %v446
    %vm448 = vweird.f32 %v442
    %vm449 = vweird.f32 %v443
    %vm450 = vmor %vm448, %vm449
    %v451 = vsel %vm450, %v443, %v447
    %v452 = vand.u32 2147483647, %v442
    %vm453 = vcmp.eq.f32.partialorder %v452, 8.507059e+37
    %v454 = vand.u32 %v442, 2147483648
    %v455 = vor.u32 1.1754944e-38, %v454
    %v456 = vsel %vm453, %v455, %v451
    %v457 = vmul.f32 %v435, %v456
    %v458 = vrot.slane %v220, 4
    %v461 = vrot.slane %v343, 2
    %v463 = vsel %vm198, %v110, %v458
    %vm464 = vcmask 1045504
    %v465 = vsel %vm464, %v463, %v461
    %vm466 = vcmask 261120
    %v468 = vsel %vm466, %v465, 0
    %470 = vmatpush.msra.mxu0 0.0
    %471 = vmatpush.msra.mxu0 0.0
    %472 = vmatpush.msra.mxu0 0.0
    %473 = vmatpush.msra.mxu0 0.0
    %474 = vmatpush.msra.mxu0 0.0
    %475 = vmatpush.msra.mxu0 0.0
    %476 = vmatpush.msra.mxu0 0.0
    %477 = vmatpush.msra.mxu0 0.0
    %478 = vmatpush.msra.mxu0 0.0
    %479 = vmatpush.msra.mxu0 0.0
    %480 = vmatpush.msra.mxu0 0.0
    %481 = vmatpush.msra.mxu0 0.0
    %482 = vmatpush.msra.mxu0 %v50
    %483 = vmatpush.msra.mxu0 %v49
    %484 = vmatpush.msra.mxu0 %v48
    %485 = vmatpush.msra.mxu0 %v47
    %486 = vmatmul.f32.gmra.mxu0 %v468
    %v487 = vpop.f32.mrf.mxu0
    %v488 = vadd.f32 0.0, %v487
    %489 = vdwg.mxu0
    %s491 = vtos %v457
    %v492 = vstv %s491
    %v494 = vmul.f32 %v488, %v492
    %495 = vset.pattern.permute.xlu0 0
    %496 = vperm.xlu0 %495, %v457
    %v497 = vpop.permute.xlu0 %496
    %v499 = vmul.f32 %v51, %v497
    %v501 = vperm.slane %v499, 0
    %503 = vxpose.xlu0.b32.start [1/16] %v134, 128
    %504 = vxpose.xlu0.b32.cont [2/16] 0.0, 128
    %505 = vxpose.xlu0.b32.cont [3/16] 0.0, 128
    %506 = vxpose.xlu0.b32.cont [4/16] 0.0, 128
    %507 = vxpose.xlu0.b32.cont [5/16] 0.0, 128
    %508 = vxpose.xlu0.b32.cont [6/16] 0.0, 128
    %509 = vxpose.xlu0.b32.cont [7/16] 0.0, 128
    %510 = vxpose.xlu0.b32.cont [8/16] 0.0, 128
    %511 = vxpose.xlu0.b32.cont [9/16] 0.0, 128
    %512 = vxpose.xlu0.b32.cont [10/16] 0.0, 128
    %513 = vxpose.xlu0.b32.cont [11/16] 0.0, 128
    %514 = vxpose.xlu0.b32.cont [12/16] 0.0, 128
    %515 = vxpose.xlu0.b32.cont [13/16] 0.0, 128
    %516 = vxpose.xlu0.b32.cont [14/16] 0.0, 128
    %517 = vxpose.xlu0.b32.cont [15/16] 0.0, 128
    %518 = vxpose.xlu0.b32.end [16/16] 0.0, 128
    %v519 = vpop.trf.xlu0
    %v520 = vpop.trf.xlu0
    %v521 = vpop.trf.xlu0
    %v522 = vpop.trf.xlu0
    %v523 = vpop.trf.xlu0
    %v524 = vpop.trf.xlu0
    %v525 = vpop.trf.xlu0
    %v526 = vpop.trf.xlu0
    %v527 = vpop.trf.xlu0
    %v528 = vpop.trf.xlu0
    %v529 = vpop.trf.xlu0
    %v530 = vpop.trf.xlu0
    %v531 = vpop.trf.xlu0
    %v532 = vpop.trf.xlu0
    %v533 = vpop.trf.xlu0
    %v534 = vpop.trf.xlu0
    %v536 = vsel %vm194, %v519, 0
    %v539 = vsel %vm198, %v494, 0
    %541 = vmatpush.msra.mxu0 0.0
    %542 = vmatpush.msra.mxu0 0.0
    %543 = vmatpush.msra.mxu0 0.0
    %544 = vmatpush.msra.mxu0 0.0
    %545 = vmatpush.msra.mxu0 0.0
    %546 = vmatpush.msra.mxu0 0.0
    %547 = vmatpush.msra.mxu0 0.0
    %548 = vmatpush.msra.mxu0 0.0
    %549 = vmatpush.msra.mxu0 0.0
    %550 = vmatpush.msra.mxu0 0.0
    %551 = vmatpush.msra.mxu0 0.0
    %552 = vmatpush.msra.mxu0 0.0
    %553 = vmatpush.msra.mxu0 0.0
    %554 = vmatpush.msra.mxu0 0.0
    %555 = vmatpush.msra.mxu0 0.0
    %556 = vmatpush.msra.mxu0 %v539
    %557 = vmatmul.f32.gmra.mxu0 %v536
    %v558 = vpop.f32.mrf.mxu0
    %v559 = vadd.f32 %v501, %v558
    %560 = vdwg.mxu0
    %vm561 = vcmask 130048
    %562 = vst.msk [vmem:[#allocation5] sm:$0xff] %vm561, %v559
    %v563 = vrot.slane %v457, 1
    %s564 = vtos %v563
    %v565 = vstv %s564
    %v567 = vmul.f32 %v488, %v565
    %v568 = vperm.slane %v497, 1
    %v570 = vmul.f32 %v51, %v568
    %v572 = vperm.slane %v570, 0
    %574 = vxpose.xlu0.b32.start [1/16] %v269, 128
    %575 = vxpose.xlu0.b32.cont [2/16] 0.0, 128
    %576 = vxpose.xlu0.b32.cont [3/16] 0.0, 128
    %577 = vxpose.xlu0.b32.cont [4/16] 0.0, 128
    %578 = vxpose.xlu0.b32.cont [5/16] 0.0, 128
    %579 = vxpose.xlu0.b32.cont [6/16] 0.0, 128
    %580 = vxpose.xlu0.b32.cont [7/16] 0.0, 128
    %581 = vxpose.xlu0.b32.cont [8/16] 0.0, 128
    %582 = vxpose.xlu0.b32.cont [9/16] 0.0, 128
    %583 = vxpose.xlu0.b32.cont [10/16] 0.0, 128
    %584 = vxpose.xlu0.b32.cont [11/16] 0.0, 128
    %585 = vxpose.xlu0.b32.cont [12/16] 0.0, 128
    %586 = vxpose.xlu0.b32.cont [13/16] 0.0, 128
    %587 = vxpose.xlu0.b32.cont [14/16] 0.0, 128
    %588 = vxpose.xlu0.b32.cont [15/16] 0.0, 128
    %589 = vxpose.xlu0.b32.end [16/16] 0.0, 128
    %v590 = vpop.trf.xlu0
    %v591 = vpop.trf.xlu0
    %v592 = vpop.trf.xlu0
    %v593 = vpop.trf.xlu0
    %v594 = vpop.trf.xlu0
    %v595 = vpop.trf.xlu0
    %v596 = vpop.trf.xlu0
    %v597 = vpop.trf.xlu0
    %v598 = vpop.trf.xlu0
    %v599 = vpop.trf.xlu0
    %v600 = vpop.trf.xlu0
    %v601 = vpop.trf.xlu0
    %v602 = vpop.trf.xlu0
    %v603 = vpop.trf.xlu0
    %v604 = vpop.trf.xlu0
    %v605 = vpop.trf.xlu0
    %v607 = vrot.slane %v567, 4
    %v609 = vsel %vm317, %v590, 0
    %v611 = vsel %vm321, %v607, 0
    %613 = vmatpush.msra.mxu0 0.0
    %614 = vmatpush.msra.mxu0 0.0
    %615 = vmatpush.msra.mxu0 0.0
    %616 = vmatpush.msra.mxu0 0.0
    %617 = vmatpush.msra.mxu0 0.0
    %618 = vmatpush.msra.mxu0 0.0
    %619 = vmatpush.msra.mxu0 0.0
    %620 = vmatpush.msra.mxu0 0.0
    %621 = vmatpush.msra.mxu0 0.0
    %622 = vmatpush.msra.mxu0 0.0
    %623 = vmatpush.msra.mxu0 0.0
    %624 = vmatpush.msra.mxu0 0.0
    %625 = vmatpush.msra.mxu0 0.0
    %626 = vmatpush.msra.mxu0 0.0
    %627 = vmatpush.msra.mxu0 0.0
    %628 = vmatpush.msra.mxu0 %v611
    %629 = vmatmul.f32.gmra.mxu0 %v609
    %v630 = vpop.f32.mrf.mxu0
    %v631 = vadd.f32 %v572, %v630
    %632 = vdwg.mxu0
    %634 = vrot.lane.b32.xlu0 %v631, 16
    %v635 = vpop.permute.xlu0 %634
    %vm637 = vcmask 261248
    %638 = vst.msk [vmem:[#allocation5] sm:$0xff] %vm637, %v635
    %v639 = vrot.slane %v497, 4
    %v641 = vmul.f32 %v488, %v639
    %v642 = vperm.slane %v497, 2
    %v644 = vmul.f32 %v51, %v642
    %v646 = vperm.slane %v644, 0
    %648 = vxpose.xlu0.b32.start [1/16] %v394, 128
    %649 = vxpose.xlu0.b32.cont [2/16] 0.0, 128
    %650 = vxpose.xlu0.b32.cont [3/16] 0.0, 128
    %651 = vxpose.xlu0.b32.cont [4/16] 0.0, 128
    %652 = vxpose.xlu0.b32.cont [5/16] 0.0, 128
    %653 = vxpose.xlu0.b32.cont [6/16] 0.0, 128
    %654 = vxpose.xlu0.b32.cont [7/16] 0.0, 128
    %655 = vxpose.xlu0.b32.cont [8/16] 0.0, 128
    %656 = vxpose.xlu0.b32.cont [9/16] 0.0, 128
    %657 = vxpose.xlu0.b32.cont [10/16] 0.0, 128
    %658 = vxpose.xlu0.b32.cont [11/16] 0.0, 128
    %659 = vxpose.xlu0.b32.cont [12/16] 0.0, 128
    %660 = vxpose.xlu0.b32.cont [13/16] 0.0, 128
    %661 = vxpose.xlu0.b32.cont [14/16] 0.0, 128
    %662 = vxpose.xlu0.b32.cont [15/16] 0.0, 128
    %663 = vxpose.xlu0.b32.end [16/16] 0.0, 128
    %v664 = vpop.trf.xlu0
    %v665 = vpop.trf.xlu0
    %v666 = vpop.trf.xlu0
    %v667 = vpop.trf.xlu0
    %v668 = vpop.trf.xlu0
    %v669 = vpop.trf.xlu0
    %v670 = vpop.trf.xlu0
    %v671 = vpop.trf.xlu0
    %v672 = vpop.trf.xlu0
    %v673 = vpop.trf.xlu0
    %v674 = vpop.trf.xlu0
    %v675 = vpop.trf.xlu0
    %v676 = vpop.trf.xlu0
    %v677 = vpop.trf.xlu0
    %v678 = vpop.trf.xlu0
    %v679 = vpop.trf.xlu0
    %v681 = vrot.slane %v641, 6
    %vm682 = vcmask 7168
    %v684 = vsel %vm682, %v664, 0
    %v686 = vsel %vm422, %v681, 0
    %688 = vmatpush.msra.mxu0 0.0
    %689 = vmatpush.msra.mxu0 0.0
    %690 = vmatpush.msra.mxu0 0.0
    %691 = vmatpush.msra.mxu0 0.0
    %692 = vmatpush.msra.mxu0 0.0
    %693 = vmatpush.msra.mxu0 0.0
    %694 = vmatpush.msra.mxu0 0.0
    %695 = vmatpush.msra.mxu0 0.0
    %696 = vmatpush.msra.mxu0 0.0
    %697 = vmatpush.msra.mxu0 0.0
    %698 = vmatpush.msra.mxu0 0.0
    %699 = vmatpush.msra.mxu0 0.0
    %700 = vmatpush.msra.mxu0 0.0
    %701 = vmatpush.msra.mxu0 0.0
    %702 = vmatpush.msra.mxu0 0.0
    %703 = vmatpush.msra.mxu0 %v686
    %704 = vmatmul.f32.gmra.mxu0 %v684
    %v705 = vpop.f32.mrf.mxu0
    %v706 = vadd.f32 %v646, %v705
    %707 = vdwg.mxu0
    %709 = vrot.lane.b32.xlu0 %v706, 32
    %v710 = vpop.permute.xlu0 %709
    %vm712 = vcmask 392448
    %713 = vst.msk [vmem:[#allocation5] sm:$0xff] %vm712, %v710
    // Predicated region
    $region42: #{tpu_custom_call.1} parent=1 // pred_check
      _
    $region43: #{tpu_custom_call.1} parent=1 // pred_check_branch
      %715 = sbr.rel (0) target = $region45
    $region44: #{tpu_custom_call.1} parent=1 // pred_region
      %717 = vsyncadd [#allocation3], 0
      %s719 = sshll.u32 [#allocation5], 4
      %s720 = int_to_ptr.vmem [resolvable:$true] %s719
      %s721 = sshll.u32 %s9, 4
      %s722 = int_to_ptr.hbm [resolvable:$true] %s721
      %724 = dma.vmem_to_hbm [thread:$0]  %s720, 128, %s722, [#allocation3]
    $region45: #{tpu_custom_call.1} parent=1 // pred_fallthru
      _
    // Predicated region
    $region46: #{tpu_custom_call.1} parent=1 // pred_check
      _
    $region47: #{tpu_custom_call.1} parent=1 // pred_check_branch
      %726 = sbr.rel (0) target = $region49
    $region48: #{tpu_custom_call.1} parent=1 // pred_region
      %728 = dma.done [#allocation3], 128
    $region49: #{tpu_custom_call.1} parent=1 // pred_fallthru
      _
    %729 = vsyncpa [#allocation3], 1
    %730 = vsyncpa [#allocation4], 1

</llo_original>
